<compile_context>
chip_gen: v7x
topology: tpu7x:2x2x1
jax: 0.10.0
libtpu: 0.0.40
codegen_flags: <defaults>
</compile_context>

<pallas_src>
import functools

import jax
import jax.numpy as jnp
from jax.experimental import pallas as pl
from jax.experimental.pallas import tpu as pltpu


def _round_up(x, m):
    return ((x + m - 1) // m) * m


def actor_kernel(x_ref, wp_ref, bp_ref, o_ref, *, in_dims, hid, out_dims, o2, o3):
    # x_ref : (in_dims, TB) f32   -- batch on the lane axis
    # wp_ref: packed f32 weights, PyTorch (out, in) orientation:
    #         rows [0:hid]            = W1 (hid, in_dims)
    #         rows [o2:o2+hid]        = W2 (hid, hid)
    #         rows [o3:o3+out_dims]   = W3 (out_dims, hid)
    # bp_ref: packed f32 biases, same row offsets, single column.
    x = x_ref[...]

    w1 = wp_ref[0:hid, 0:in_dims]
    w2 = wp_ref[o2:o2 + hid, 0:hid]
    w3 = wp_ref[o3:o3 + out_dims, 0:hid]
    b1 = bp_ref[0:hid, :]                  # (hid, 1) broadcast over lanes
    b2 = bp_ref[o2:o2 + hid, :]
    b3 = bp_ref[o3:o3 + out_dims, :]

    # fc1 + ReLU   (f32 matmul, f32 accumulation)
    h1 = jnp.dot(w1, x, preferred_element_type=jnp.float32) + b1
    h1 = jnp.maximum(h1, 0.0)

    # fc2 + ReLU
    h2 = jnp.dot(w2, h1, preferred_element_type=jnp.float32) + b2
    h2 = jnp.maximum(h2, 0.0)

    # fc3 -> logits: (out_dims, TB)
    logits = jnp.dot(w3, h2, preferred_element_type=jnp.float32) + b3

    # numerically stable softmax over the feature (sublane) axis; exact divide
    # so probabilities sum to 1 (PPO takes log-probs of these).
    m = jnp.max(logits, axis=0, keepdims=True)
    e = jnp.exp(logits - m)
    denom = jnp.sum(e, axis=0, keepdims=True)
    o_ref[...] = (e / denom).astype(o_ref.dtype)


def pack_params(params):
    """Pack PyTorch-layout (out_features, in_features) weights into one f32
    buffer and biases into one column buffer.  Row segments start at multiples
    of 8 so the static in-kernel slices are sublane-aligned."""
    w1, b1 = params["w1"], params["b1"]   # (hid, in),  (hid,)
    w2, b2 = params["w2"], params["b2"]   # (hid, hid), (hid,)
    w3, b3 = params["w3"], params["b3"]   # (out, hid), (out,)

    hid, in_dims = w1.shape
    out_dims = w3.shape[0]
    width = max(in_dims, hid)

    o2 = _round_up(hid, 8)
    o3 = o2 + _round_up(hid, 8)
    rows = o3 + _round_up(out_dims, 8)

    wp = jnp.zeros((rows, width), jnp.float32)
    wp = wp.at[0:hid, 0:in_dims].set(w1.astype(jnp.float32))
    wp = wp.at[o2:o2 + hid, 0:hid].set(w2.astype(jnp.float32))
    wp = wp.at[o3:o3 + out_dims, 0:hid].set(w3.astype(jnp.float32))

    bp = jnp.zeros((rows, 1), jnp.float32)
    bp = bp.at[0:hid, 0].set(b1.reshape(-1).astype(jnp.float32))
    bp = bp.at[o2:o2 + hid, 0].set(b2.reshape(-1).astype(jnp.float32))
    bp = bp.at[o3:o3 + out_dims, 0].set(b3.reshape(-1).astype(jnp.float32))

    meta = dict(in_dims=in_dims, hid=hid, out_dims=out_dims, o2=o2, o3=o3)
    return wp, bp, meta


def actor_forward(state, packed, *, block_b=2048):
    """state: (B, input_dims) f32.  packed = pack_params(params).
    Returns (B, output_dims) softmax probabilities."""
    wp, bp, meta = packed
    B, in_dims = state.shape
    out_dims = meta["out_dims"]

    # Batch tile on the lane axis: multiple of 128 lanes; small batches
    # collapse to a single grid step, large batches give >=2 parallel steps
    # (megacore sharding on v7x).  Padded columns are zero -> bias-only
    # logits -> finite softmax, sliced off afterwards.
    TB = min(block_b, _round_up(B, 128))
    Bp = _round_up(B, TB)
    if Bp != B:
        state = jnp.pad(state, ((0, Bp - B), (0, 0)))
    state_t = state.T                       # (in_dims, Bp): batch on lanes

    kernel = functools.partial(actor_kernel, **meta)

    out_t = pl.pallas_call(
        kernel,
        out_shape=jax.ShapeDtypeStruct((out_dims, Bp), jnp.float32),
        grid_spec=pltpu.PrefetchScalarGridSpec(
            num_scalar_prefetch=0,
            grid=(Bp // TB,),
            in_specs=[
                # state: one lane-dense batch tile per grid step (pipelined)
                pl.BlockSpec((in_dims, TB), lambda i: (0, i)),
                # packed weights / biases: constant block index -> VMEM-resident
                pl.BlockSpec(wp.shape, lambda i: (0, 0)),
                pl.BlockSpec(bp.shape, lambda i: (0, 0)),
            ],
            out_specs=pl.BlockSpec((out_dims, TB), lambda i: (0, i)),
        ),
        compiler_params=pltpu.CompilerParams(
            dimension_semantics=("parallel",),   # batch tiles are independent
        ),
    )(state_t, wp, bp)

    return out_t[:, :B].T                   # back to (B, out_dims)


def init_params(key, input_dims, hidden_units, output_dims):
    """Deterministic init mimicking torch.nn.Linear default
    (uniform +-1/sqrt(fan_in)); weights in PyTorch (out_features, in_features)."""
    def linear(k, fan_in, fan_out):
        kw, kb = jax.random.split(k)
        bound = 1.0 / jnp.sqrt(fan_in)
        w = jax.random.uniform(kw, (fan_out, fan_in), jnp.float32, -bound, bound)
        b = jax.random.uniform(kb, (fan_out,), jnp.float32, -bound, bound)
        return w, b

    k1, k2, k3 = jax.random.split(key, 3)
    w1, b1 = linear(k1, input_dims, hidden_units)
    w2, b2 = linear(k2, hidden_units, hidden_units)
    w3, b3 = linear(k3, hidden_units, output_dims)
    return {"w1": w1, "b1": b1, "w2": w2, "b2": b2, "w3": w3, "b3": b3}


def _ref_forward(x, p):
    h = jnp.maximum(x @ p["w1"].T + p["b1"], 0.0)
    h = jnp.maximum(h @ p["w2"].T + p["b2"], 0.0)
    logits = h @ p["w3"].T + p["b3"]
    return jax.nn.softmax(logits, axis=-1)


# TODO(synk): Adam optimizer / L1Loss from the PyTorch module are training-side
# state, not part of forward(); not implemented here.

if __name__ == "__main__":
    key = jax.random.PRNGKey(0)
    k_state, k_params = jax.random.split(key)

    batch = 200          # not a multiple of the tile -> exercises padding path
    input_dims = 16
    hidden_units = 16    # ActorNetwork default hidden_units=16
    output_dims = 8

    state = jax.random.normal(k_state, (batch, input_dims), jnp.float32)
    params = init_params(k_params, input_dims, hidden_units, output_dims)
    packed = pack_params(params)

    probs = actor_forward(state, packed)
    jax.block_until_ready(probs)

    # correctness vs pure-JAX f32 reference
    ref = _ref_forward(state, params)
    assert probs.shape == (batch, output_dims)
    row_sums = jnp.sum(probs, axis=-1)
    assert jnp.allclose(row_sums, jnp.ones_like(row_sums), atol=1e-4), \
        float(jnp.max(jnp.abs(row_sums - 1.0)))
    assert jnp.allclose(probs, ref, atol=5e-3), \
        float(jnp.max(jnp.abs(probs - ref)))

    print("KERNEL_OK")
</pallas_src>

<mosaic_0001>
module attributes {stable_mosaic.version = 11 : i64} {
  func.func @actor_kernel(%arg0: i32, %arg1: memref<16x256xf32, #tpu.memory_space<vmem>>, %arg2: memref<40x16xf32, #tpu.memory_space<vmem>>, %arg3: memref<40x1xf32, #tpu.memory_space<vmem>>, %arg4: memref<8x256xf32, #tpu.memory_space<vmem>>) attributes {dimension_semantics = [#tpu.dimension_semantics<parallel>], iteration_bounds = array<i64: 1>, scalar_prefetch = 0 : i64, scratch_operands = 0 : i64, tpu.core_type = #tpu.core_type<tc>, window_params = [{transform_indices = @transform_0, window_bounds = array<i64: 16, 256>}, {pipeline_mode = #tpu.pipeline_mode<synchronous>, transform_indices = @transform_1, window_bounds = array<i64: 40, 16>}, {pipeline_mode = #tpu.pipeline_mode<synchronous>, transform_indices = @transform_2, window_bounds = array<i64: 40, 1>}, {transform_indices = @transform_3, window_bounds = array<i64: 8, 256>}]} {
    %c0 = arith.constant 0 : index
    %c0_0 = arith.constant 0 : index
    %0 = vector.load %arg1[%c0, %c0_0] : memref<16x256xf32, #tpu.memory_space<vmem>>, vector<16x256xf32>
    %c0_1 = arith.constant 0 : index
    %c0_2 = arith.constant 0 : index
    %1 = vector.load %arg2[%c0_1, %c0_2] : memref<40x16xf32, #tpu.memory_space<vmem>>, vector<16x16xf32>
    %c16 = arith.constant 16 : index
    %c0_3 = arith.constant 0 : index
    %2 = vector.load %arg2[%c16, %c0_3] : memref<40x16xf32, #tpu.memory_space<vmem>>, vector<16x16xf32>
    %c32 = arith.constant 32 : index
    %c0_4 = arith.constant 0 : index
    %3 = vector.load %arg2[%c32, %c0_4] : memref<40x16xf32, #tpu.memory_space<vmem>>, vector<8x16xf32>
    %c0_5 = arith.constant 0 : index
    %c0_6 = arith.constant 0 : index
    %4 = vector.load %arg3[%c0_5, %c0_6] : memref<40x1xf32, #tpu.memory_space<vmem>>, vector<16x1xf32>
    %c16_7 = arith.constant 16 : index
    %c0_8 = arith.constant 0 : index
    %5 = vector.load %arg3[%c16_7, %c0_8] : memref<40x1xf32, #tpu.memory_space<vmem>>, vector<16x1xf32>
    %c32_9 = arith.constant 32 : index
    %c0_10 = arith.constant 0 : index
    %6 = vector.load %arg3[%c32_9, %c0_10] : memref<40x1xf32, #tpu.memory_space<vmem>>, vector<8x1xf32>
    %cst = arith.constant dense<0.000000e+00> : vector<16x256xf32>
    %7 = tpu.matmul %1, %0, %cst {dimension_numbers = #tpu.dot_dimension_numbers<[1], [0], [0], [1], [0, 0, 1, 1], [], []>} : vector<16x16xf32>, vector<16x256xf32>, vector<16x256xf32> -> vector<16x256xf32>
    %8 = vector.broadcast %4 : vector<16x1xf32> to vector<16x256xf32>
    %9 = arith.addf %7, %8 : vector<16x256xf32>
    %cst_11 = arith.constant 0.000000e+00 : f32
    %10 = vector.broadcast %cst_11 : f32 to vector<16x256xf32>
    %11 = arith.maximumf %9, %10 : vector<16x256xf32>
    %cst_12 = arith.constant dense<0.000000e+00> : vector<16x256xf32>
    %12 = tpu.matmul %2, %11, %cst_12 {dimension_numbers = #tpu.dot_dimension_numbers<[1], [0], [0], [1], [0, 0, 1, 1], [], []>} : vector<16x16xf32>, vector<16x256xf32>, vector<16x256xf32> -> vector<16x256xf32>
    %13 = vector.broadcast %5 : vector<16x1xf32> to vector<16x256xf32>
    %14 = arith.addf %12, %13 : vector<16x256xf32>
    %cst_13 = arith.constant 0.000000e+00 : f32
    %15 = vector.broadcast %cst_13 : f32 to vector<16x256xf32>
    %16 = arith.maximumf %14, %15 : vector<16x256xf32>
    %cst_14 = arith.constant dense<0.000000e+00> : vector<8x256xf32>
    %17 = tpu.matmul %3, %16, %cst_14 {dimension_numbers = #tpu.dot_dimension_numbers<[1], [0], [0], [1], [0, 0, 1, 1], [], []>} : vector<8x16xf32>, vector<16x256xf32>, vector<8x256xf32> -> vector<8x256xf32>
    %18 = vector.broadcast %6 : vector<8x1xf32> to vector<8x256xf32>
    %19 = arith.addf %17, %18 : vector<8x256xf32>
    %cst_15 = arith.constant dense<0xFF800000> : vector<256xf32>
    %20 = vector.multi_reduction <maximumf>, %19, %cst_15 [0] : vector<8x256xf32> to vector<256xf32>
    %21 = vector.shape_cast %20 : vector<256xf32> to vector<1x256xf32>
    %22 = vector.broadcast %21 : vector<1x256xf32> to vector<8x256xf32>
    %23 = arith.subf %19, %22 : vector<8x256xf32>
    %24 = math.exp %23 : vector<8x256xf32>
    %cst_16 = arith.constant dense<0.000000e+00> : vector<256xf32>
    %25 = vector.multi_reduction <add>, %24, %cst_16 [0] : vector<8x256xf32> to vector<256xf32>
    %26 = vector.shape_cast %25 : vector<256xf32> to vector<1x256xf32>
    %27 = vector.broadcast %26 : vector<1x256xf32> to vector<8x256xf32>
    %28 = arith.divf %24, %27 : vector<8x256xf32>
    %c0_17 = arith.constant 0 : index
    %c0_18 = arith.constant 0 : index
    %29 = vector.load %arg4[%c0_17, %c0_18] : memref<8x256xf32, #tpu.memory_space<vmem>>, vector<8x256xf32>
    tpu.vector_store %arg4[%c0_17, %c0_18], %28 {strides = array<i32>} : memref<8x256xf32, #tpu.memory_space<vmem>>, vector<8x256xf32>,
    return
  }
  func.func @transform_0(%arg0: i32) -> (i32, i32) {
    %c0_i32 = arith.constant 0 : i32
    %c0_i32_0 = arith.constant 0 : i32
    return %c0_i32, %arg0 : i32, i32
  }
  func.func @transform_1(%arg0: i32) -> (i32, i32) {
    %c0_i32 = arith.constant 0 : i32
    %c0_i32_0 = arith.constant 0 : i32
    %c0_i32_1 = arith.constant 0 : i32
    return %c0_i32, %c0_i32_0 : i32, i32
  }
  func.func @transform_2(%arg0: i32) -> (i32, i32) {
    %c0_i32 = arith.constant 0 : i32
    %c0_i32_0 = arith.constant 0 : i32
    %c0_i32_1 = arith.constant 0 : i32
    return %c0_i32, %c0_i32_0 : i32, i32
  }
  func.func @transform_3(%arg0: i32) -> (i32, i32) {
    %c0_i32 = arith.constant 0 : i32
    %c0_i32_0 = arith.constant 0 : i32
    return %c0_i32, %arg0 : i32, i32
  }
}

</mosaic_0001>

<llo_original>
// kernel: tpu_custom_call.1
$region0: #{tpu_custom_call.1}
  #allocation0 [shape = 'u32[]', space=smem, size = 0x4, offset = 0x4, fixed_abs, tag = 'smem constant byte address 0x4 - core index']
  #allocation1 [shape = 'u32[144,128]{1,0:T(1,128)}', space=vmem, size = 0x12000, scoped, tag = 'internal scratch']
  %s0 = inlined_call_operand.vmem [shape: f32[16,256], index: 0, kind: input, shape index: {}]
  %s1 = inlined_call_operand.vmem [shape: f32[40,16], index: 1, kind: input, shape index: {}]
  %s2 = inlined_call_operand.vmem [shape: f32[40,1], index: 2, kind: input, shape index: {}]
  %s3 = inlined_call_operand.hbm [shape: f32[8,256], index: 3, kind: output, shape index: {}]
  %s4 = sld [smem:[#allocation0]]
  $region22: #{tpu_custom_call.1} parent=0
    _
  %s6 = ssub.s32 1, %s4
  %s7 = scalar_select 0, %s6, %s4
  $region1: #{tpu_custom_call.1} parent=0
    #allocation2 [shape = 'u8[8192]{0}', space=vmem, size = 0x2000, scoped, tag = 'output window, operand 0, single buffered']
    #allocation3 [shape = 's32[1]{0}', space=sflag, size = 0x4, scoped, tag = 'scoped memory for tpu_custom_call.1']
    %8 = vsyncpa [#allocation3], 0
    // Predicated region
    $region2: #{tpu_custom_call.1} parent=1 // pred_check
      _
    $region3: #{tpu_custom_call.1} parent=1 // pred_check_branch
      %10 = sbr.rel (0) target = $region5
    $region4: #{tpu_custom_call.1} parent=1 // pred_region
      _
    $region5: #{tpu_custom_call.1} parent=1 // pred_fallthru
      _
    // Predicated region
    $region6: #{tpu_custom_call.1} parent=1 // pred_check
      _
    $region7: #{tpu_custom_call.1} parent=1 // pred_check_branch
      %12 = sbr.rel (0) target = $region9
    $region8: #{tpu_custom_call.1} parent=1 // pred_region
      _
    $region9: #{tpu_custom_call.1} parent=1 // pred_fallthru
      _
    // Predicated region
    $region10: #{tpu_custom_call.1} parent=1 // pred_check
      _
    $region11: #{tpu_custom_call.1} parent=1 // pred_check_branch
      %14 = sbr.rel (0) target = $region13
    $region12: #{tpu_custom_call.1} parent=1 // pred_region
      _
    $region13: #{tpu_custom_call.1} parent=1 // pred_fallthru
      _
    %v15 = vld [vmem:[%s0] sm:$0xff]
    %v16 = vld [vmem:[%s0 + $0x8] sm:$0xff]
    %v17 = vld [vmem:[%s0 + $0x10] sm:$0xff]
    %v18 = vld [vmem:[%s0 + $0x18] sm:$0xff]
    %v19 = vld [vmem:[%s1] sm:$0xff]
    %v20 = vld [vmem:[%s1 + $0x8] sm:$0xff]
    %v21 = vld [vmem:[%s1 + $0x10] sm:$0xff]
    %v22 = vld [vmem:[%s1 + $0x18] sm:$0xff]
    %v23 = vld [vmem:[%s1 + $0x20] sm:$0xff]
    %v24 = vld [vmem:[%s2] sm:$0xff]
    %v25 = vld [vmem:[%s2 + $0x8] sm:$0xff]
    %v26 = vld [vmem:[%s2 + $0x10] sm:$0xff]
    %v27 = vld [vmem:[%s2 + $0x18] sm:$0xff]
    %v28 = vld [vmem:[%s2 + $0x20] sm:$0xff]
    %30 = vset.pattern.permute.xlu0 0
    %31 = vperm.xlu0 %30, %v24
    %v32 = vpop.permute.xlu0 %31
    %35 = vset.pattern.permute.xlu0 0
    %36 = vperm.xlu0 %35, %v25
    %v37 = vpop.permute.xlu0 %36
    %vm39 = vcmask 130048
    %v41 = vsel %vm39, %v19, 0
    %v44 = vsel %vm39, %v20, 0
    %46 = vmatprep.subr.mxu0 %v16
    %47 = vmatpush1.msra.mxu0 %v15
    %48 = vmatprep.subr.mxu0 %v18
    %49 = vmatpush1.msra.mxu0 %v17
    %50 = vmatprep.subr.mxu0 0.0
    %51 = vmatpush1.msra.mxu0 0.0
    %52 = vmatprep.subr.mxu0 0.0
    %53 = vmatpush1.msra.mxu0 0.0
    %54 = vmatprep.subr.mxu0 0.0
    %55 = vmatpush1.msra.mxu0 0.0
    %56 = vmatprep.subr.mxu0 0.0
    %57 = vmatpush1.msra.mxu0 0.0
    %58 = vmatprep.subr.mxu0 0.0
    %59 = vmatpush1.msra.mxu0 0.0
    %60 = vmatprep.subr.mxu0 0.0
    %61 = vmatpush1.msra.mxu0 0.0
    %62 = vmatprep.subr.mxu0 0.0
    %63 = vmatpush1.msra.mxu0 0.0
    %64 = vmatprep.subr.mxu0 0.0
    %65 = vmatpush1.msra.mxu0 0.0
    %66 = vmatprep.subr.mxu0 0.0
    %67 = vmatpush1.msra.mxu0 0.0
    %68 = vmatprep.subr.mxu0 0.0
    %69 = vmatpush1.msra.mxu0 0.0
    %70 = vmatprep.subr.mxu0 0.0
    %71 = vmatpush1.msra.mxu0 0.0
    %72 = vmatprep.subr.mxu0 0.0
    %73 = vmatpush1.msra.mxu0 0.0
    %74 = vmatprep.subr.mxu0 0.0
    %75 = vmatpush1.msra.mxu0 0.0
    %76 = vmatprep.subr.mxu0 0.0
    %77 = vmatpush1.msra.mxu0 0.0
    %78 = vmatprep.subr.mxu0 0.0
    %79 = vmatpush1.msra.mxu0 0.0
    %80 = vmatprep.subr.mxu0 0.0
    %81 = vmatpush1.msra.mxu0 0.0
    %82 = vmatprep.subr.mxu0 0.0
    %83 = vmatpush1.msra.mxu0 0.0
    %84 = vmatprep.subr.mxu0 0.0
    %85 = vmatpush1.msra.mxu0 0.0
    %86 = vmatprep.subr.mxu0 0.0
    %87 = vmatpush1.msra.mxu0 0.0
    %88 = vmatprep.subr.mxu0 0.0
    %89 = vmatpush1.msra.mxu0 0.0
    %90 = vmatprep.subr.mxu0 0.0
    %91 = vmatpush1.msra.mxu0 0.0
    %92 = vmatprep.subr.mxu0 0.0
    %93 = vmatpush1.msra.mxu0 0.0
    %94 = vmatprep.subr.mxu0 0.0
    %95 = vmatpush1.msra.mxu0 0.0
    %96 = vmatprep.subr.mxu0 0.0
    %97 = vmatpush1.msra.mxu0 0.0
    %98 = vmatprep.subr.mxu0 0.0
    %99 = vmatpush1.msra.mxu0 0.0
    %100 = vmatprep.subr.mxu0 0.0
    %101 = vmatpush1.msra.mxu0 0.0
    %102 = vmatprep.subr.mxu0 0.0
    %103 = vmatpush1.msra.mxu0 0.0
    %104 = vmatprep.subr.mxu0 0.0
    %105 = vmatpush1.msra.mxu0 0.0
    %106 = vmatprep.subr.mxu0 0.0
    %107 = vmatpush1.msra.mxu0 0.0
    %108 = vmatprep.subr.mxu0 0.0
    %109 = vmatpush1.msra.mxu0 0.0
    %110 = vmatprep.mubr.f32.mxu0 0.0
    %111 = vmatmul.mubr.f32.gmra.mrb[0].mxu0 %v41
    %v112 = vpop.f32.mrb[0].mxu0
    %v113 = vadd.f32 %v32, %v112
    %v114 = vpop.f32.mrb[0].mxu0
    %v115 = vadd.f32 %v32, %v114
    %116 = vmatprep.mubr.f32.mxu0 0.0
    %117 = vmatmul.mubr.f32.gmra.mrb[0].mxu0 %v44
    %v118 = vpop.f32.mrb[0].mxu0
    %v119 = vadd.f32 %v37, %v118
    %v120 = vpop.f32.mrb[0].mxu0
    %v121 = vadd.f32 %v37, %v120
    %122 = vdwg.mxu0
    %v123 = vmax.f32 %v113, 0.0
    %v124 = vmax.f32 %v115, 0.0
    %v125 = vmax.f32 %v119, 0.0
    %v126 = vmax.f32 %v121, 0.0
    %128 = vset.pattern.permute.xlu0 0
    %129 = vperm.xlu0 %128, %v26
    %v130 = vpop.permute.xlu0 %129
    %133 = vset.pattern.permute.xlu0 0
    %134 = vperm.xlu0 %133, %v27
    %v135 = vpop.permute.xlu0 %134
    %v138 = vsel %vm39, %v21, 0
    %v141 = vsel %vm39, %v22, 0
    %143 = vmatprep.subr.mxu0 %v124
    %144 = vmatpush1.msra.mxu0 %v123
    %145 = vmatprep.subr.mxu0 %v126
    %146 = vmatpush1.msra.mxu0 %v125
    %147 = vmatprep.subr.mxu0 0.0
    %148 = vmatpush1.msra.mxu0 0.0
    %149 = vmatprep.subr.mxu0 0.0
    %150 = vmatpush1.msra.mxu0 0.0
    %151 = vmatprep.subr.mxu0 0.0
    %152 = vmatpush1.msra.mxu0 0.0
    %153 = vmatprep.subr.mxu0 0.0
    %154 = vmatpush1.msra.mxu0 0.0
    %155 = vmatprep.subr.mxu0 0.0
    %156 = vmatpush1.msra.mxu0 0.0
    %157 = vmatprep.subr.mxu0 0.0
    %158 = vmatpush1.msra.mxu0 0.0
    %159 = vmatprep.subr.mxu0 0.0
    %160 = vmatpush1.msra.mxu0 0.0
    %161 = vmatprep.subr.mxu0 0.0
    %162 = vmatpush1.msra.mxu0 0.0
    %163 = vmatprep.subr.mxu0 0.0
    %164 = vmatpush1.msra.mxu0 0.0
    %165 = vmatprep.subr.mxu0 0.0
    %166 = vmatpush1.msra.mxu0 0.0
    %167 = vmatprep.subr.mxu0 0.0
    %168 = vmatpush1.msra.mxu0 0.0
    %169 = vmatprep.subr.mxu0 0.0
    %170 = vmatpush1.msra.mxu0 0.0
    %171 = vmatprep.subr.mxu0 0.0
    %172 = vmatpush1.msra.mxu0 0.0
    %173 = vmatprep.subr.mxu0 0.0
    %174 = vmatpush1.msra.mxu0 0.0
    %175 = vmatprep.subr.mxu0 0.0
    %176 = vmatpush1.msra.mxu0 0.0
    %177 = vmatprep.subr.mxu0 0.0
    %178 = vmatpush1.msra.mxu0 0.0
    %179 = vmatprep.subr.mxu0 0.0
    %180 = vmatpush1.msra.mxu0 0.0
    %181 = vmatprep.subr.mxu0 0.0
    %182 = vmatpush1.msra.mxu0 0.0
    %183 = vmatprep.subr.mxu0 0.0
    %184 = vmatpush1.msra.mxu0 0.0
    %185 = vmatprep.subr.mxu0 0.0
    %186 = vmatpush1.msra.mxu0 0.0
    %187 = vmatprep.subr.mxu0 0.0
    %188 = vmatpush1.msra.mxu0 0.0
    %189 = vmatprep.subr.mxu0 0.0
    %190 = vmatpush1.msra.mxu0 0.0
    %191 = vmatprep.subr.mxu0 0.0
    %192 = vmatpush1.msra.mxu0 0.0
    %193 = vmatprep.subr.mxu0 0.0
    %194 = vmatpush1.msra.mxu0 0.0
    %195 = vmatprep.subr.mxu0 0.0
    %196 = vmatpush1.msra.mxu0 0.0
    %197 = vmatprep.subr.mxu0 0.0
    %198 = vmatpush1.msra.mxu0 0.0
    %199 = vmatprep.subr.mxu0 0.0
    %200 = vmatpush1.msra.mxu0 0.0
    %201 = vmatprep.subr.mxu0 0.0
    %202 = vmatpush1.msra.mxu0 0.0
    %203 = vmatprep.subr.mxu0 0.0
    %204 = vmatpush1.msra.mxu0 0.0
    %205 = vmatprep.subr.mxu0 0.0
    %206 = vmatpush1.msra.mxu0 0.0
    %207 = vmatprep.mubr.f32.mxu0 0.0
    %208 = vmatmul.mubr.f32.gmra.mrb[0].mxu0 %v138
    %v209 = vpop.f32.mrb[0].mxu0
    %v210 = vadd.f32 %v130, %v209
    %v211 = vpop.f32.mrb[0].mxu0
    %v212 = vadd.f32 %v130, %v211
    %213 = vmatprep.mubr.f32.mxu0 0.0
    %214 = vmatmul.mubr.f32.gmra.mrb[0].mxu0 %v141
    %v215 = vpop.f32.mrb[0].mxu0
    %v216 = vadd.f32 %v135, %v215
    %v217 = vpop.f32.mrb[0].mxu0
    %v218 = vadd.f32 %v135, %v217
    %219 = vdwg.mxu0
    %v220 = vmax.f32 %v210, 0.0
    %v221 = vmax.f32 %v212, 0.0
    %v222 = vmax.f32 %v216, 0.0
    %v223 = vmax.f32 %v218, 0.0
    %225 = vset.pattern.permute.xlu0 0
    %226 = vperm.xlu0 %225, %v28
    %v227 = vpop.permute.xlu0 %226
    %v230 = vsel %vm39, %v23, 0
    %232 = vmatprep.subr.mxu0 %v221
    %233 = vmatpush1.msra.mxu0 %v220
    %234 = vmatprep.subr.mxu0 %v223
    %235 = vmatpush1.msra.mxu0 %v222
    %236 = vmatprep.subr.mxu0 0.0
    %237 = vmatpush1.msra.mxu0 0.0
    %238 = vmatprep.subr.mxu0 0.0
    %239 = vmatpush1.msra.mxu0 0.0
    %240 = vmatprep.subr.mxu0 0.0
    %241 = vmatpush1.msra.mxu0 0.0
    %242 = vmatprep.subr.mxu0 0.0
    %243 = vmatpush1.msra.mxu0 0.0
    %244 = vmatprep.subr.mxu0 0.0
    %245 = vmatpush1.msra.mxu0 0.0
    %246 = vmatprep.subr.mxu0 0.0
    %247 = vmatpush1.msra.mxu0 0.0
    %248 = vmatprep.subr.mxu0 0.0
    %249 = vmatpush1.msra.mxu0 0.0
    %250 = vmatprep.subr.mxu0 0.0
    %251 = vmatpush1.msra.mxu0 0.0
    %252 = vmatprep.subr.mxu0 0.0
    %253 = vmatpush1.msra.mxu0 0.0
    %254 = vmatprep.subr.mxu0 0.0
    %255 = vmatpush1.msra.mxu0 0.0
    %256 = vmatprep.subr.mxu0 0.0
    %257 = vmatpush1.msra.mxu0 0.0
    %258 = vmatprep.subr.mxu0 0.0
    %259 = vmatpush1.msra.mxu0 0.0
    %260 = vmatprep.subr.mxu0 0.0
    %261 = vmatpush1.msra.mxu0 0.0
    %262 = vmatprep.subr.mxu0 0.0
    %263 = vmatpush1.msra.mxu0 0.0
    %264 = vmatprep.subr.mxu0 0.0
    %265 = vmatpush1.msra.mxu0 0.0
    %266 = vmatprep.subr.mxu0 0.0
    %267 = vmatpush1.msra.mxu0 0.0
    %268 = vmatprep.subr.mxu0 0.0
    %269 = vmatpush1.msra.mxu0 0.0
    %270 = vmatprep.subr.mxu0 0.0
    %271 = vmatpush1.msra.mxu0 0.0
    %272 = vmatprep.subr.mxu0 0.0
    %273 = vmatpush1.msra.mxu0 0.0
    %274 = vmatprep.subr.mxu0 0.0
    %275 = vmatpush1.msra.mxu0 0.0
    %276 = vmatprep.subr.mxu0 0.0
    %277 = vmatpush1.msra.mxu0 0.0
    %278 = vmatprep.subr.mxu0 0.0
    %279 = vmatpush1.msra.mxu0 0.0
    %280 = vmatprep.subr.mxu0 0.0
    %281 = vmatpush1.msra.mxu0 0.0
    %282 = vmatprep.subr.mxu0 0.0
    %283 = vmatpush1.msra.mxu0 0.0
    %284 = vmatprep.subr.mxu0 0.0
    %285 = vmatpush1.msra.mxu0 0.0
    %286 = vmatprep.subr.mxu0 0.0
    %287 = vmatpush1.msra.mxu0 0.0
    %288 = vmatprep.subr.mxu0 0.0
    %289 = vmatpush1.msra.mxu0 0.0
    %290 = vmatprep.subr.mxu0 0.0
    %291 = vmatpush1.msra.mxu0 0.0
    %292 = vmatprep.subr.mxu0 0.0
    %293 = vmatpush1.msra.mxu0 0.0
    %294 = vmatprep.subr.mxu0 0.0
    %295 = vmatpush1.msra.mxu0 0.0
    %296 = vmatprep.mubr.f32.mxu0 0.0
    %297 = vmatmul.mubr.f32.gmra.mrb[0].mxu0 %v230
    %v298 = vpop.f32.mrb[0].mxu0
    %v299 = vadd.f32 %v227, %v298
    %v300 = vpop.f32.mrb[0].mxu0
    %v301 = vadd.f32 %v227, %v300
    %302 = vdwg.mxu0
    %v303 = vrot.slane %v299, 4
    %v304 = vmax.f32 %v299, %v303
    %v305 = vrot.slane %v304, 2
    %v306 = vmax.f32 %v304, %v305
    %v307 = vrot.slane %v306, 1
    %v308 = vmax.f32 %v306, %v307
    %v309 = vrot.slane %v301, 4
    %v310 = vmax.f32 %v301, %v309
    %v311 = vrot.slane %v310, 2
    %v312 = vmax.f32 %v310, %v311
    %v313 = vrot.slane %v312, 1
    %v314 = vmax.f32 %v312, %v313
    %v315 = vsub.f32 %v299, %v308
    %v316 = vsub.f32 %v301, %v314
    %v317 = vmul.f32 %v315, 1.442695
    %v318 = vpow.pop %v317
    %v319 = vmul.f32 %v316, 1.442695
    %v320 = vpow.pop %v319
    %v321 = vrot.slane %v318, 4
    %v322 = vadd.f32 %v318, %v321
    %v323 = vrot.slane %v322, 2
    %v324 = vadd.f32 %v322, %v323
    %v325 = vrot.slane %v324, 1
    %v326 = vadd.f32 %v324, %v325
    %v327 = vrot.slane %v320, 4
    %v328 = vadd.f32 %v320, %v327
    %v329 = vrot.slane %v328, 2
    %v330 = vadd.f32 %v328, %v329
    %v331 = vrot.slane %v330, 1
    %v332 = vadd.f32 %v330, %v331
    %v333 = vrcp.pop %v326
    %v334 = vmul.f32 %v318, %v333
    %v335 = vrcp.pop %v332
    %v336 = vmul.f32 %v320, %v335
    %337 = vst [vmem:[#allocation2] sm:$0xff] %v334
    %338 = vst [vmem:[#allocation2 + $0x8] sm:$0xff] %v336
    // Predicated region
    $region14: #{tpu_custom_call.1} parent=1 // pred_check
      _
    $region15: #{tpu_custom_call.1} parent=1 // pred_check_branch
      %340 = sbr.rel (0) target = $region17
    $region16: #{tpu_custom_call.1} parent=1 // pred_region
      %s342 = ssub.s32 256, 256
      %343 = vsyncadd [#allocation3], %s342
      %s345 = sshll.u32 [#allocation2], 4
      %s346 = int_to_ptr.vmem [resolvable:$true] %s345
      %348 = dma.vmem_to_hbm [thread:$0]  %s346, 256, %s3, [#allocation3]
    $region17: #{tpu_custom_call.1} parent=1 // pred_fallthru
      _
    // Predicated region
    $region18: #{tpu_custom_call.1} parent=1 // pred_check
      _
    $region19: #{tpu_custom_call.1} parent=1 // pred_check_branch
      %350 = sbr.rel (0) target = $region21
    $region20: #{tpu_custom_call.1} parent=1 // pred_region
      %351 = dma.done [#allocation3], 256
    $region21: #{tpu_custom_call.1} parent=1 // pred_fallthru
      _
    %352 = vsyncpa [#allocation3], 1

</llo_original>
